<compile_context>
chip_gen: v7x
topology: tpu7x:2x2x1
jax: 0.10.0
libtpu: 0.0.40
codegen_flags: <defaults>
</compile_context>

<pallas_src>
import functools

import numpy as np
import jax
import jax.numpy as jnp
from jax import lax
from jax.experimental import pallas as pl
from jax.experimental.pallas import tpu as pltpu


def _sepconv_kernel(x_ref, dw_ref, pw_ref, mask_ref, o_ref, *, KH, KW, W, pad, HW):
    """One packed block of NB images per grid step.

    x_ref   : (NB*Cin, HW)        VMEM  packed NCHW input, spatial flat on lanes
    dw_ref  : (KH*KW, NB*Cin, 1)  VMEM  depthwise weights, one column per tap
    pw_ref  : (NB*Cout, NB*Cin)   VMEM  block-diagonal 1x1 weights
    mask_ref: (KH*KW, 1, HW)      VMEM  precomputed 0/1 border (zero-pad) masks
    o_ref   : (NB*Cout, HW)       VMEM  packed NCHW output, spatial flat on lanes
    """
    x = x_ref[...]                                      # (NB*Cin, HW), lane-dense

    # Hoist all per-tap weight columns and masks out of the unrolled tap loop.
    w_taps = [dw_ref[t] for t in range(KH * KW)]        # each (NB*Cin, 1)
    m_taps = [mask_ref[t] for t in range(KH * KW)]      # each (1, HW)

    # ---- depthwise 3x3: per-tap lane roll (XLU) + mask mul + VPU FMA ----
    center = pad * KW + pad
    acc = x * w_taps[center]                            # center tap: no roll, no mask
    for kh in range(KH):
        for kw in range(KW):
            t = kh * KW + kw
            dh, dwd = kh - pad, kw - pad
            if dh == 0 and dwd == 0:
                continue
            shift = dh * W + dwd                        # combined h/w shift in flat space
            xs = pltpu.roll(x, shift=(-shift) % HW, axis=1)
            acc = acc + (xs * m_taps[t]) * w_taps[t]    # mask implements zero padding

    # ---- pointwise 1x1: block-diag (NB*Cout,NB*Cin) @ (NB*Cin,HW) on the MXU ----
    out = jnp.dot(pw_ref[...], acc, preferred_element_type=jnp.float32)
    o_ref[...] = out.astype(o_ref.dtype)


def _pick_nb(N, Cin, HW, itemsize):
    """Number of images packed (along sublanes) into one grid step."""
    target_bytes = 512 * 1024            # per-step input budget (amortizes step/DMA cost)
    per_image = Cin * HW * itemsize
    legal = [nb for nb in range(1, N + 1)
             if N % nb == 0 and ((nb * Cin) % 8 == 0 or nb == N)]

    def score(nb):
        return (
            nb * Cin >= 8,                                    # fill all 8 sublanes
            nb * per_image <= max(target_bytes, per_image),   # respect block budget (VMEM-safe on v7x too)
            min(nb * per_image, target_bytes),                # prefer bigger blocks up to the budget
            (N // nb) >= 2,                                   # >=2 parallel steps keeps both v7x TCs busy
        )

    return max(legal, key=score)


def _border_masks(H, W, KH, KW, pad, dtype):
    """(KH*KW, 1, H*W) 0/1 masks: which output positions see an in-image tap."""
    pos = np.arange(H * W)
    h_pos, w_pos = pos // W, pos % W
    masks = []
    for kh in range(KH):
        for kw in range(KW):
            dh, dwd = kh - pad, kw - pad
            m = np.ones(H * W, dtype=bool)
            if dh < 0:
                m &= h_pos >= -dh
            if dh > 0:
                m &= h_pos < H - dh
            if dwd < 0:
                m &= w_pos >= -dwd
            if dwd > 0:
                m &= w_pos < W - dwd
            masks.append(m)
    return jnp.asarray(np.stack(masks)[:, None, :].astype(dtype))


def separable_conv2d(x_nchw, dw_weight, pw_weight, *, kernel_size=3, stride=1,
                     padding=1, dilation=1):
    """Matches PyTorch SeparableConv2d.forward (stride=1, dilation=1, bias=False).

    x_nchw   : (N, Cin, H, W)
    dw_weight: (Cin, 1, KH, KW)   -- nn.Conv2d(groups=Cin) weight layout
    pw_weight: (Cout, Cin, 1, 1)  -- nn.Conv2d 1x1 weight layout
    returns  : (N, Cout, H, W)
    """
    assert stride == 1 and dilation == 1, "synthetic config uses stride=1, dilation=1"
    N, Cin, H, W = x_nchw.shape
    Cout = pw_weight.shape[0]
    KH = KW = kernel_size
    assert 2 * padding == KH - 1, "in-kernel padding assumes 'same'-size output"
    HW = H * W

    NB = _pick_nb(N, Cin, HW, x_nchw.dtype.itemsize)
    assert N % NB == 0
    steps = N // NB

    # Free (layout-preserving) reshape of the activation; no transpose, no pad.
    x_flat = x_nchw.reshape(N * Cin, HW)

    # Tiny trace-time weight/mask re-packs (not on the activation hot path).
    dw_cols = jnp.transpose(dw_weight[:, 0, :, :], (1, 2, 0)).reshape(KH * KW, Cin)
    dw_tap = jnp.tile(dw_cols, (1, NB))[..., None]               # (KH*KW, NB*Cin, 1)
    pw_mat = pw_weight[:, :, 0, 0]                               # (Cout, Cin)
    pw_bd = jnp.kron(jnp.eye(NB, dtype=pw_mat.dtype), pw_mat)    # (NB*Cout, NB*Cin) block-diag
    masks = _border_masks(H, W, KH, KW, padding, x_nchw.dtype)   # (KH*KW, 1, HW)

    kernel = functools.partial(_sepconv_kernel, KH=KH, KW=KW, W=W, pad=padding, HW=HW)

    out_flat = pl.pallas_call(
        kernel,
        out_shape=jax.ShapeDtypeStruct((N * Cout, HW), x_nchw.dtype),
        grid_spec=pltpu.PrefetchScalarGridSpec(
            num_scalar_prefetch=0,
            grid=(steps,),
            in_specs=[
                pl.BlockSpec((NB * Cin, HW), lambda n: (n, 0)),
                pl.BlockSpec((KH * KW, NB * Cin, 1), lambda n: (0, 0, 0)),
                pl.BlockSpec((NB * Cout, NB * Cin), lambda n: (0, 0)),
                pl.BlockSpec((KH * KW, 1, HW), lambda n: (0, 0, 0)),
            ],
            out_specs=pl.BlockSpec((NB * Cout, HW), lambda n: (n, 0)),
        ),
        compiler_params=pltpu.CompilerParams(
            dimension_semantics=("parallel",),
            vmem_limit_bytes=32 * 1024 * 1024,
        ),
    )(x_flat, dw_tap, pw_bd, masks)

    # Free reshape back to NCHW (no transpose).
    return out_flat.reshape(N, Cout, H, W)


def _reference(x_nchw, dw_weight, pw_weight, *, padding=1):
    """Pure-JAX reference using lax conv (for correctness check)."""
    Cin = x_nchw.shape[1]
    dn = jax.lax.conv_dimension_numbers(x_nchw.shape, dw_weight.shape,
                                        ("NCHW", "OIHW", "NCHW"))
    y = jax.lax.conv_general_dilated(
        x_nchw, dw_weight, window_strides=(1, 1),
        padding=((padding, padding), (padding, padding)),
        dimension_numbers=dn, feature_group_count=Cin)
    dn2 = jax.lax.conv_dimension_numbers(y.shape, pw_weight.shape,
                                         ("NCHW", "OIHW", "NCHW"))
    return jax.lax.conv_general_dilated(
        y, pw_weight, window_strides=(1, 1), padding="VALID",
        dimension_numbers=dn2)


if __name__ == "__main__":
    key = jax.random.PRNGKey(0)
    k_x, k_dw, k_pw = jax.random.split(key, 3)

    N, Cin, Cout, H, W = 2, 4, 8, 16, 16
    kernel_size, padding = 3, 1

    x = jax.random.normal(k_x, (N, Cin, H, W), dtype=jnp.float32)
    dw_weight = jax.random.normal(k_dw, (Cin, 1, kernel_size, kernel_size),
                                  dtype=jnp.float32) * 0.1
    pw_weight = jax.random.normal(k_pw, (Cout, Cin, 1, 1), dtype=jnp.float32) * 0.1

    fwd = jax.jit(functools.partial(separable_conv2d,
                                    kernel_size=kernel_size, padding=padding))
    out = jax.block_until_ready(fwd(x, dw_weight, pw_weight))

    ref = jax.block_until_ready(_reference(x, dw_weight, pw_weight, padding=padding))
    assert out.shape == (N, Cout, H, W), out.shape
    assert jnp.allclose(out, ref, atol=1e-5, rtol=1e-5), "mismatch vs reference"

    print("KERNEL_OK")
</pallas_src>

<mosaic_0001>
module attributes {stable_mosaic.version = 11 : i64} {
  func.func @_sepconv_kernel(%arg0: i32, %arg1: memref<8x256xf32, #tpu.memory_space<vmem>>, %arg2: memref<9x8x1xf32, #tpu.memory_space<vmem>>, %arg3: memref<16x8xf32, #tpu.memory_space<vmem>>, %arg4: memref<9x1x256xf32, #tpu.memory_space<vmem>>, %arg5: memref<16x256xf32, #tpu.memory_space<vmem>>) attributes {dimension_semantics = [#tpu.dimension_semantics<parallel>], iteration_bounds = array<i64: 1>, scalar_prefetch = 0 : i64, scratch_operands = 0 : i64, tpu.core_type = #tpu.core_type<tc>, window_params = [{transform_indices = @transform_0, window_bounds = array<i64: 8, 256>}, {pipeline_mode = #tpu.pipeline_mode<synchronous>, transform_indices = @transform_1, window_bounds = array<i64: 9, 8, 1>}, {pipeline_mode = #tpu.pipeline_mode<synchronous>, transform_indices = @transform_2, window_bounds = array<i64: 16, 8>}, {pipeline_mode = #tpu.pipeline_mode<synchronous>, transform_indices = @transform_3, window_bounds = array<i64: 9, 1, 256>}, {transform_indices = @transform_4, window_bounds = array<i64: 16, 256>}]} {
    %c0 = arith.constant 0 : index
    %c0_0 = arith.constant 0 : index
    %0 = vector.load %arg1[%c0, %c0_0] : memref<8x256xf32, #tpu.memory_space<vmem>>, vector<8x256xf32>
    %c0_1 = arith.constant 0 : index
    %c0_2 = arith.constant 0 : index
    %c0_3 = arith.constant 0 : index
    %1 = vector.load %arg2[%c0_1, %c0_2, %c0_3] : memref<9x8x1xf32, #tpu.memory_space<vmem>>, vector<1x8x1xf32>
    %2 = vector.shape_cast %1 : vector<1x8x1xf32> to vector<8x1xf32>
    %c1 = arith.constant 1 : index
    %c0_4 = arith.constant 0 : index
    %c0_5 = arith.constant 0 : index
    %3 = vector.load %arg2[%c1, %c0_4, %c0_5] : memref<9x8x1xf32, #tpu.memory_space<vmem>>, vector<1x8x1xf32>
    %4 = vector.shape_cast %3 : vector<1x8x1xf32> to vector<8x1xf32>
    %c2 = arith.constant 2 : index
    %c0_6 = arith.constant 0 : index
    %c0_7 = arith.constant 0 : index
    %5 = vector.load %arg2[%c2, %c0_6, %c0_7] : memref<9x8x1xf32, #tpu.memory_space<vmem>>, vector<1x8x1xf32>
    %6 = vector.shape_cast %5 : vector<1x8x1xf32> to vector<8x1xf32>
    %c3 = arith.constant 3 : index
    %c0_8 = arith.constant 0 : index
    %c0_9 = arith.constant 0 : index
    %7 = vector.load %arg2[%c3, %c0_8, %c0_9] : memref<9x8x1xf32, #tpu.memory_space<vmem>>, vector<1x8x1xf32>
    %8 = vector.shape_cast %7 : vector<1x8x1xf32> to vector<8x1xf32>
    %c4 = arith.constant 4 : index
    %c0_10 = arith.constant 0 : index
    %c0_11 = arith.constant 0 : index
    %9 = vector.load %arg2[%c4, %c0_10, %c0_11] : memref<9x8x1xf32, #tpu.memory_space<vmem>>, vector<1x8x1xf32>
    %10 = vector.shape_cast %9 : vector<1x8x1xf32> to vector<8x1xf32>
    %c5 = arith.constant 5 : index
    %c0_12 = arith.constant 0 : index
    %c0_13 = arith.constant 0 : index
    %11 = vector.load %arg2[%c5, %c0_12, %c0_13] : memref<9x8x1xf32, #tpu.memory_space<vmem>>, vector<1x8x1xf32>
    %12 = vector.shape_cast %11 : vector<1x8x1xf32> to vector<8x1xf32>
    %c6 = arith.constant 6 : index
    %c0_14 = arith.constant 0 : index
    %c0_15 = arith.constant 0 : index
    %13 = vector.load %arg2[%c6, %c0_14, %c0_15] : memref<9x8x1xf32, #tpu.memory_space<vmem>>, vector<1x8x1xf32>
    %14 = vector.shape_cast %13 : vector<1x8x1xf32> to vector<8x1xf32>
    %c7 = arith.constant 7 : index
    %c0_16 = arith.constant 0 : index
    %c0_17 = arith.constant 0 : index
    %15 = vector.load %arg2[%c7, %c0_16, %c0_17] : memref<9x8x1xf32, #tpu.memory_space<vmem>>, vector<1x8x1xf32>
    %16 = vector.shape_cast %15 : vector<1x8x1xf32> to vector<8x1xf32>
    %c8 = arith.constant 8 : index
    %c0_18 = arith.constant 0 : index
    %c0_19 = arith.constant 0 : index
    %17 = vector.load %arg2[%c8, %c0_18, %c0_19] : memref<9x8x1xf32, #tpu.memory_space<vmem>>, vector<1x8x1xf32>
    %18 = vector.shape_cast %17 : vector<1x8x1xf32> to vector<8x1xf32>
    %c0_20 = arith.constant 0 : index
    %c0_21 = arith.constant 0 : index
    %c0_22 = arith.constant 0 : index
    %19 = vector.load %arg4[%c0_20, %c0_21, %c0_22] : memref<9x1x256xf32, #tpu.memory_space<vmem>>, vector<1x1x256xf32>
    %20 = vector.shape_cast %19 : vector<1x1x256xf32> to vector<1x256xf32>
    %c1_23 = arith.constant 1 : index
    %c0_24 = arith.constant 0 : index
    %c0_25 = arith.constant 0 : index
    %21 = vector.load %arg4[%c1_23, %c0_24, %c0_25] : memref<9x1x256xf32, #tpu.memory_space<vmem>>, vector<1x1x256xf32>
    %22 = vector.shape_cast %21 : vector<1x1x256xf32> to vector<1x256xf32>
    %c2_26 = arith.constant 2 : index
    %c0_27 = arith.constant 0 : index
    %c0_28 = arith.constant 0 : index
    %23 = vector.load %arg4[%c2_26, %c0_27, %c0_28] : memref<9x1x256xf32, #tpu.memory_space<vmem>>, vector<1x1x256xf32>
    %24 = vector.shape_cast %23 : vector<1x1x256xf32> to vector<1x256xf32>
    %c3_29 = arith.constant 3 : index
    %c0_30 = arith.constant 0 : index
    %c0_31 = arith.constant 0 : index
    %25 = vector.load %arg4[%c3_29, %c0_30, %c0_31] : memref<9x1x256xf32, #tpu.memory_space<vmem>>, vector<1x1x256xf32>
    %26 = vector.shape_cast %25 : vector<1x1x256xf32> to vector<1x256xf32>
    %c5_32 = arith.constant 5 : index
    %c0_33 = arith.constant 0 : index
    %c0_34 = arith.constant 0 : index
    %27 = vector.load %arg4[%c5_32, %c0_33, %c0_34] : memref<9x1x256xf32, #tpu.memory_space<vmem>>, vector<1x1x256xf32>
    %28 = vector.shape_cast %27 : vector<1x1x256xf32> to vector<1x256xf32>
    %c6_35 = arith.constant 6 : index
    %c0_36 = arith.constant 0 : index
    %c0_37 = arith.constant 0 : index
    %29 = vector.load %arg4[%c6_35, %c0_36, %c0_37] : memref<9x1x256xf32, #tpu.memory_space<vmem>>, vector<1x1x256xf32>
    %30 = vector.shape_cast %29 : vector<1x1x256xf32> to vector<1x256xf32>
    %c7_38 = arith.constant 7 : index
    %c0_39 = arith.constant 0 : index
    %c0_40 = arith.constant 0 : index
    %31 = vector.load %arg4[%c7_38, %c0_39, %c0_40] : memref<9x1x256xf32, #tpu.memory_space<vmem>>, vector<1x1x256xf32>
    %32 = vector.shape_cast %31 : vector<1x1x256xf32> to vector<1x256xf32>
    %c8_41 = arith.constant 8 : index
    %c0_42 = arith.constant 0 : index
    %c0_43 = arith.constant 0 : index
    %33 = vector.load %arg4[%c8_41, %c0_42, %c0_43] : memref<9x1x256xf32, #tpu.memory_space<vmem>>, vector<1x1x256xf32>
    %34 = vector.shape_cast %33 : vector<1x1x256xf32> to vector<1x256xf32>
    %35 = vector.broadcast %10 : vector<8x1xf32> to vector<8x256xf32>
    %36 = arith.mulf %0, %35 : vector<8x256xf32>
    %c17_i32 = arith.constant 17 : i32
    %37 = tpu.dynamic_rotate %0 by %c17_i32 dim 1 : vector<8x256xf32>, i32 -> vector<8x256xf32>
    %38 = vector.broadcast %20 : vector<1x256xf32> to vector<8x256xf32>
    %39 = arith.mulf %37, %38 : vector<8x256xf32>
    %40 = vector.broadcast %2 : vector<8x1xf32> to vector<8x256xf32>
    %41 = arith.mulf %39, %40 : vector<8x256xf32>
    %42 = arith.addf %36, %41 : vector<8x256xf32>
    %c16_i32 = arith.constant 16 : i32
    %43 = tpu.dynamic_rotate %0 by %c16_i32 dim 1 : vector<8x256xf32>, i32 -> vector<8x256xf32>
    %44 = vector.broadcast %22 : vector<1x256xf32> to vector<8x256xf32>
    %45 = arith.mulf %43, %44 : vector<8x256xf32>
    %46 = vector.broadcast %4 : vector<8x1xf32> to vector<8x256xf32>
    %47 = arith.mulf %45, %46 : vector<8x256xf32>
    %48 = arith.addf %42, %47 : vector<8x256xf32>
    %c15_i32 = arith.constant 15 : i32
    %49 = tpu.dynamic_rotate %0 by %c15_i32 dim 1 : vector<8x256xf32>, i32 -> vector<8x256xf32>
    %50 = vector.broadcast %24 : vector<1x256xf32> to vector<8x256xf32>
    %51 = arith.mulf %49, %50 : vector<8x256xf32>
    %52 = vector.broadcast %6 : vector<8x1xf32> to vector<8x256xf32>
    %53 = arith.mulf %51, %52 : vector<8x256xf32>
    %54 = arith.addf %48, %53 : vector<8x256xf32>
    %c1_i32 = arith.constant 1 : i32
    %55 = tpu.dynamic_rotate %0 by %c1_i32 dim 1 : vector<8x256xf32>, i32 -> vector<8x256xf32>
    %56 = vector.broadcast %26 : vector<1x256xf32> to vector<8x256xf32>
    %57 = arith.mulf %55, %56 : vector<8x256xf32>
    %58 = vector.broadcast %8 : vector<8x1xf32> to vector<8x256xf32>
    %59 = arith.mulf %57, %58 : vector<8x256xf32>
    %60 = arith.addf %54, %59 : vector<8x256xf32>
    %c255_i32 = arith.constant 255 : i32
    %61 = tpu.dynamic_rotate %0 by %c255_i32 dim 1 : vector<8x256xf32>, i32 -> vector<8x256xf32>
    %62 = vector.broadcast %28 : vector<1x256xf32> to vector<8x256xf32>
    %63 = arith.mulf %61, %62 : vector<8x256xf32>
    %64 = vector.broadcast %12 : vector<8x1xf32> to vector<8x256xf32>
    %65 = arith.mulf %63, %64 : vector<8x256xf32>
    %66 = arith.addf %60, %65 : vector<8x256xf32>
    %c241_i32 = arith.constant 241 : i32
    %67 = tpu.dynamic_rotate %0 by %c241_i32 dim 1 : vector<8x256xf32>, i32 -> vector<8x256xf32>
    %68 = vector.broadcast %30 : vector<1x256xf32> to vector<8x256xf32>
    %69 = arith.mulf %67, %68 : vector<8x256xf32>
    %70 = vector.broadcast %14 : vector<8x1xf32> to vector<8x256xf32>
    %71 = arith.mulf %69, %70 : vector<8x256xf32>
    %72 = arith.addf %66, %71 : vector<8x256xf32>
    %c240_i32 = arith.constant 240 : i32
    %73 = tpu.dynamic_rotate %0 by %c240_i32 dim 1 : vector<8x256xf32>, i32 -> vector<8x256xf32>
    %74 = vector.broadcast %32 : vector<1x256xf32> to vector<8x256xf32>
    %75 = arith.mulf %73, %74 : vector<8x256xf32>
    %76 = vector.broadcast %16 : vector<8x1xf32> to vector<8x256xf32>
    %77 = arith.mulf %75, %76 : vector<8x256xf32>
    %78 = arith.addf %72, %77 : vector<8x256xf32>
    %c239_i32 = arith.constant 239 : i32
    %79 = tpu.dynamic_rotate %0 by %c239_i32 dim 1 : vector<8x256xf32>, i32 -> vector<8x256xf32>
    %80 = vector.broadcast %34 : vector<1x256xf32> to vector<8x256xf32>
    %81 = arith.mulf %79, %80 : vector<8x256xf32>
    %82 = vector.broadcast %18 : vector<8x1xf32> to vector<8x256xf32>
    %83 = arith.mulf %81, %82 : vector<8x256xf32>
    %84 = arith.addf %78, %83 : vector<8x256xf32>
    %c0_44 = arith.constant 0 : index
    %c0_45 = arith.constant 0 : index
    %85 = vector.load %arg3[%c0_44, %c0_45] : memref<16x8xf32, #tpu.memory_space<vmem>>, vector<16x8xf32>
    %cst = arith.constant dense<0.000000e+00> : vector<16x256xf32>
    %86 = tpu.matmul %85, %84, %cst {dimension_numbers = #tpu.dot_dimension_numbers<[1], [0], [0], [1], [0, 0, 1, 1], [], []>} : vector<16x8xf32>, vector<8x256xf32>, vector<16x256xf32> -> vector<16x256xf32>
    %c0_46 = arith.constant 0 : index
    %c0_47 = arith.constant 0 : index
    %87 = vector.load %arg5[%c0_46, %c0_47] : memref<16x256xf32, #tpu.memory_space<vmem>>, vector<16x256xf32>
    tpu.vector_store %arg5[%c0_46, %c0_47], %86 {strides = array<i32>} : memref<16x256xf32, #tpu.memory_space<vmem>>, vector<16x256xf32>,
    return
  }
  func.func @transform_0(%arg0: i32) -> (i32, i32) {
    %c0_i32 = arith.constant 0 : i32
    %c0_i32_0 = arith.constant 0 : i32
    return %arg0, %c0_i32 : i32, i32
  }
  func.func @transform_1(%arg0: i32) -> (i32, i32, i32) {
    %c0_i32 = arith.constant 0 : i32
    %c0_i32_0 = arith.constant 0 : i32
    %c0_i32_1 = arith.constant 0 : i32
    %c0_i32_2 = arith.constant 0 : i32
    return %c0_i32, %c0_i32_0, %c0_i32_1 : i32, i32, i32
  }
  func.func @transform_2(%arg0: i32) -> (i32, i32) {
    %c0_i32 = arith.constant 0 : i32
    %c0_i32_0 = arith.constant 0 : i32
    %c0_i32_1 = arith.constant 0 : i32
    return %c0_i32, %c0_i32_0 : i32, i32
  }
  func.func @transform_3(%arg0: i32) -> (i32, i32, i32) {
    %c0_i32 = arith.constant 0 : i32
    %c0_i32_0 = arith.constant 0 : i32
    %c0_i32_1 = arith.constant 0 : i32
    %c0_i32_2 = arith.constant 0 : i32
    return %c0_i32, %c0_i32_0, %c0_i32_1 : i32, i32, i32
  }
  func.func @transform_4(%arg0: i32) -> (i32, i32) {
    %c0_i32 = arith.constant 0 : i32
    %c0_i32_0 = arith.constant 0 : i32
    return %arg0, %c0_i32 : i32, i32
  }
}

</mosaic_0001>

<llo_original>
// kernel: separable_conv2d.1
$region0: #{separable_conv2d.1}
  #allocation0 [shape = 'u32[]', space=smem, size = 0x4, offset = 0x4, fixed_abs, tag = 'smem constant byte address 0x4 - core index']
  #allocation1 [shape = 'u32[144,128]{1,0:T(1,128)}', space=vmem, size = 0x12000, scoped, tag = 'internal scratch']
  %s0 = inlined_call_operand.vmem [shape: f32[8,256], index: 0, kind: input, shape index: {}]
  %s1 = inlined_call_operand.vmem [shape: f32[9,8,1], index: 1, kind: input, shape index: {}]
  %s2 = inlined_call_operand.vmem [shape: f32[16,8], index: 2, kind: input, shape index: {}]
  %s3 = inlined_call_operand.vmem [shape: f32[9,1,256], index: 3, kind: input, shape index: {}]
  %s4 = inlined_call_operand.vmem [shape: f32[16,256], index: 4, kind: output, shape index: {}]
  %s5 = sld [smem:[#allocation0]]
  $region26: #{separable_conv2d.1} parent=0
    _
  %s7 = ssub.s32 1, %s5
  %s8 = scalar_select 0, %s7, %s5
  // Predicated region
  $region2: #{separable_conv2d.1} parent=0 // pred_check
    _
  $region3: #{separable_conv2d.1} parent=0 // pred_check_branch
    %10 = sbr.rel (0) target = $region5
  $region4: #{separable_conv2d.1} parent=0 // pred_region
    _
  $region5: #{separable_conv2d.1} parent=0 // pred_fallthru
    _
  // Predicated region
  $region6: #{separable_conv2d.1} parent=0 // pred_check
    _
  $region7: #{separable_conv2d.1} parent=0 // pred_check_branch
    %12 = sbr.rel (0) target = $region9
  $region8: #{separable_conv2d.1} parent=0 // pred_region
    _
  $region9: #{separable_conv2d.1} parent=0 // pred_fallthru
    _
  // Predicated region
  $region10: #{separable_conv2d.1} parent=0 // pred_check
    _
  $region11: #{separable_conv2d.1} parent=0 // pred_check_branch
    %14 = sbr.rel (0) target = $region13
  $region12: #{separable_conv2d.1} parent=0 // pred_region
    _
  $region13: #{separable_conv2d.1} parent=0 // pred_fallthru
    _
  // Predicated region
  $region14: #{separable_conv2d.1} parent=0 // pred_check
    _
  $region15: #{separable_conv2d.1} parent=0 // pred_check_branch
    %16 = sbr.rel (0) target = $region17
  $region16: #{separable_conv2d.1} parent=0 // pred_region
    _
  $region17: #{separable_conv2d.1} parent=0 // pred_fallthru
    _
  %v17 = vld [vmem:[%s0] sm:$0xff]
  %v18 = vld [vmem:[%s0 + $0x8] sm:$0xff]
  %v19 = vld [vmem:[%s1] sm:$0xff]
  %s20 = scalar_lea.vmem %s1, 8
  %v21 = vld [vmem:[%s20] sm:$0xff]
  %s22 = scalar_lea.vmem %s1, 16
  %v23 = vld [vmem:[%s22] sm:$0xff]
  %s24 = scalar_lea.vmem %s1, 24
  %v25 = vld [vmem:[%s24] sm:$0xff]
  %s26 = scalar_lea.vmem %s1, 32
  %v27 = vld [vmem:[%s26] sm:$0xff]
  %s28 = scalar_lea.vmem %s1, 40
  %v29 = vld [vmem:[%s28] sm:$0xff]
  %s30 = scalar_lea.vmem %s1, 48
  %v31 = vld [vmem:[%s30] sm:$0xff]
  %s32 = scalar_lea.vmem %s1, 56
  %v33 = vld [vmem:[%s32] sm:$0xff]
  %s34 = scalar_lea.vmem %s1, 64
  %v35 = vld [vmem:[%s34] sm:$0xff]
  %v36 = vld [vmem:[%s3] sm:$0x3]
  %s37 = scalar_lea.vmem %s3, 2
  %v38 = vld [vmem:[%s37] sm:$0x3]
  %s39 = scalar_lea.vmem %s3, 4
  %v40 = vld [vmem:[%s39] sm:$0x3]
  %s41 = scalar_lea.vmem %s3, 6
  %v42 = vld [vmem:[%s41] sm:$0x3]
  %s43 = scalar_lea.vmem %s3, 10
  %v44 = vld [vmem:[%s43] sm:$0x3]
  %s45 = scalar_lea.vmem %s3, 12
  %v46 = vld [vmem:[%s45] sm:$0x3]
  %s47 = scalar_lea.vmem %s3, 14
  %v48 = vld [vmem:[%s47] sm:$0x3]
  %s49 = scalar_lea.vmem %s3, 16
  %v50 = vld [vmem:[%s49] sm:$0x3]
  %52 = vset.pattern.permute.xlu0 0
  %53 = vperm.xlu0 %52, %v27
  %v54 = vpop.permute.xlu0 %53
  %v56 = vmul.f32 %v17, %v54
  %v57 = vmul.f32 %v18, %v54
  %58 = vrot.lane.b32.xlu0 %v17, 17
  %v59 = vpop.permute.xlu0 %58
  %60 = vrot.lane.b32.xlu0 %v18, 17
  %v61 = vpop.permute.xlu0 %60
  %v62 = vlaneseq
  %v63 = vand.u32 %v62, 127
  %vm64 = vcmp.lt.s32.totalorder %v63, 17
  %v65 = vsel %vm64, %v59, %v61
  %v66 = vsel %vm64, %v61, %v59
  %v68 = vlaneseq
  %v69 = vshrl.u32 %v68, 7
  %v70 = vsub.s32 0, %v69
  %v71 = vrot.slane %v36, %v70
  %v72 = vlaneseq
  %v73 = vshrl.u32 %v72, 7
  %v74 = vsub.s32 1, %v73
  %v75 = vrot.slane %v36, %v74
  %v78 = vmul.f32 %v66, %v71
  %v79 = vmul.f32 %v65, %v75
  %81 = vset.pattern.permute.xlu0 0
  %82 = vperm.xlu0 %81, %v19
  %v83 = vpop.permute.xlu0 %82
  %v85 = vmul.f32 %v78, %v83
  %v86 = vmul.f32 %v79, %v83
  %v87 = vadd.f32 %v56, %v85
  %v88 = vadd.f32 %v57, %v86
  %89 = vrot.lane.b32.xlu0 %v17, 16
  %v90 = vpop.permute.xlu0 %89
  %91 = vrot.lane.b32.xlu0 %v18, 16
  %v92 = vpop.permute.xlu0 %91
  %vm93 = vcmp.lt.s32.totalorder %v63, 16
  %v94 = vsel %vm93, %v90, %v92
  %v95 = vsel %vm93, %v92, %v90
  %v97 = vlaneseq
  %v98 = vshrl.u32 %v97, 7
  %v99 = vsub.s32 0, %v98
  %v100 = vrot.slane %v38, %v99
  %v101 = vlaneseq
  %v102 = vshrl.u32 %v101, 7
  %v103 = vsub.s32 1, %v102
  %v104 = vrot.slane %v38, %v103
  %v107 = vmul.f32 %v95, %v100
  %v108 = vmul.f32 %v94, %v104
  %110 = vset.pattern.permute.xlu0 0
  %111 = vperm.xlu0 %110, %v21
  %v112 = vpop.permute.xlu0 %111
  %v114 = vmul.f32 %v107, %v112
  %v115 = vmul.f32 %v108, %v112
  %v116 = vadd.f32 %v87, %v114
  %v117 = vadd.f32 %v88, %v115
  %118 = vrot.lane.b32.xlu0 %v17, 15
  %v119 = vpop.permute.xlu0 %118
  %120 = vrot.lane.b32.xlu0 %v18, 15
  %v121 = vpop.permute.xlu0 %120
  %vm122 = vcmp.lt.s32.totalorder %v63, 15
  %v123 = vsel %vm122, %v119, %v121
  %v124 = vsel %vm122, %v121, %v119
  %v126 = vlaneseq
  %v127 = vshrl.u32 %v126, 7
  %v128 = vsub.s32 0, %v127
  %v129 = vrot.slane %v40, %v128
  %v130 = vlaneseq
  %v131 = vshrl.u32 %v130, 7
  %v132 = vsub.s32 1, %v131
  %v133 = vrot.slane %v40, %v132
  %v136 = vmul.f32 %v124, %v129
  %v137 = vmul.f32 %v123, %v133
  %139 = vset.pattern.permute.xlu0 0
  %140 = vperm.xlu0 %139, %v23
  %v141 = vpop.permute.xlu0 %140
  %v143 = vmul.f32 %v136, %v141
  %v144 = vmul.f32 %v137, %v141
  %v145 = vadd.f32 %v116, %v143
  %v146 = vadd.f32 %v117, %v144
  %147 = vrot.lane.b32.xlu0 %v17, 1
  %v148 = vpop.permute.xlu0 %147
  %149 = vrot.lane.b32.xlu0 %v18, 1
  %v150 = vpop.permute.xlu0 %149
  %vm151 = vcmp.lt.s32.totalorder %v63, 1
  %v152 = vsel %vm151, %v148, %v150
  %v153 = vsel %vm151, %v150, %v148
  %v155 = vlaneseq
  %v156 = vshrl.u32 %v155, 7
  %v157 = vsub.s32 0, %v156
  %v158 = vrot.slane %v42, %v157
  %v159 = vlaneseq
  %v160 = vshrl.u32 %v159, 7
  %v161 = vsub.s32 1, %v160
  %v162 = vrot.slane %v42, %v161
  %v165 = vmul.f32 %v153, %v158
  %v166 = vmul.f32 %v152, %v162
  %168 = vset.pattern.permute.xlu0 0
  %169 = vperm.xlu0 %168, %v25
  %v170 = vpop.permute.xlu0 %169
  %v172 = vmul.f32 %v165, %v170
  %v173 = vmul.f32 %v166, %v170
  %v174 = vadd.f32 %v145, %v172
  %v175 = vadd.f32 %v146, %v173
  %176 = vrot.lane.b32.xlu0 %v17, 127
  %v177 = vpop.permute.xlu0 %176
  %178 = vrot.lane.b32.xlu0 %v18, 127
  %v179 = vpop.permute.xlu0 %178
  %vm180 = vcmp.lt.s32.totalorder %v63, 127
  %v181 = vsel %vm180, %v177, %v179
  %v182 = vsel %vm180, %v179, %v177
  %v184 = vlaneseq
  %v185 = vshrl.u32 %v184, 7
  %v186 = vsub.s32 0, %v185
  %v187 = vrot.slane %v44, %v186
  %v188 = vlaneseq
  %v189 = vshrl.u32 %v188, 7
  %v190 = vsub.s32 1, %v189
  %v191 = vrot.slane %v44, %v190
  %v194 = vmul.f32 %v181, %v187
  %v195 = vmul.f32 %v182, %v191
  %197 = vset.pattern.permute.xlu0 0
  %198 = vperm.xlu0 %197, %v29
  %v199 = vpop.permute.xlu0 %198
  %v201 = vmul.f32 %v194, %v199
  %v202 = vmul.f32 %v195, %v199
  %v203 = vadd.f32 %v174, %v201
  %v204 = vadd.f32 %v175, %v202
  %205 = vrot.lane.b32.xlu0 %v17, 113
  %v206 = vpop.permute.xlu0 %205
  %207 = vrot.lane.b32.xlu0 %v18, 113
  %v208 = vpop.permute.xlu0 %207
  %vm209 = vcmp.lt.s32.totalorder %v63, 113
  %v210 = vsel %vm209, %v206, %v208
  %v211 = vsel %vm209, %v208, %v206
  %v213 = vlaneseq
  %v214 = vshrl.u32 %v213, 7
  %v215 = vsub.s32 0, %v214
  %v216 = vrot.slane %v46, %v215
  %v217 = vlaneseq
  %v218 = vshrl.u32 %v217, 7
  %v219 = vsub.s32 1, %v218
  %v220 = vrot.slane %v46, %v219
  %v223 = vmul.f32 %v210, %v216
  %v224 = vmul.f32 %v211, %v220
  %226 = vset.pattern.permute.xlu0 0
  %227 = vperm.xlu0 %226, %v31
  %v228 = vpop.permute.xlu0 %227
  %v230 = vmul.f32 %v223, %v228
  %v231 = vmul.f32 %v224, %v228
  %v232 = vadd.f32 %v203, %v230
  %v233 = vadd.f32 %v204, %v231
  %234 = vrot.lane.b32.xlu0 %v17, 112
  %v235 = vpop.permute.xlu0 %234
  %236 = vrot.lane.b32.xlu0 %v18, 112
  %v237 = vpop.permute.xlu0 %236
  %vm238 = vcmp.lt.s32.totalorder %v63, 112
  %v239 = vsel %vm238, %v235, %v237
  %v240 = vsel %vm238, %v237, %v235
  %v242 = vlaneseq
  %v243 = vshrl.u32 %v242, 7
  %v244 = vsub.s32 0, %v243
  %v245 = vrot.slane %v48, %v244
  %v246 = vlaneseq
  %v247 = vshrl.u32 %v246, 7
  %v248 = vsub.s32 1, %v247
  %v249 = vrot.slane %v48, %v248
  %v252 = vmul.f32 %v239, %v245
  %v253 = vmul.f32 %v240, %v249
  %255 = vset.pattern.permute.xlu0 0
  %256 = vperm.xlu0 %255, %v33
  %v257 = vpop.permute.xlu0 %256
  %v259 = vmul.f32 %v252, %v257
  %v260 = vmul.f32 %v253, %v257
  %v261 = vadd.f32 %v232, %v259
  %v262 = vadd.f32 %v233, %v260
  %263 = vrot.lane.b32.xlu0 %v17, 111
  %v264 = vpop.permute.xlu0 %263
  %265 = vrot.lane.b32.xlu0 %v18, 111
  %v266 = vpop.permute.xlu0 %265
  %vm267 = vcmp.lt.s32.totalorder %v63, 111
  %v268 = vsel %vm267, %v264, %v266
  %v269 = vsel %vm267, %v266, %v264
  %v271 = vlaneseq
  %v272 = vshrl.u32 %v271, 7
  %v273 = vsub.s32 0, %v272
  %v274 = vrot.slane %v50, %v273
  %v275 = vlaneseq
  %v276 = vshrl.u32 %v275, 7
  %v277 = vsub.s32 1, %v276
  %v278 = vrot.slane %v50, %v277
  %v281 = vmul.f32 %v268, %v274
  %v282 = vmul.f32 %v269, %v278
  %284 = vset.pattern.permute.xlu0 0
  %285 = vperm.xlu0 %284, %v35
  %v286 = vpop.permute.xlu0 %285
  %v288 = vmul.f32 %v281, %v286
  %v289 = vmul.f32 %v282, %v286
  %v290 = vadd.f32 %v261, %v288
  %v291 = vadd.f32 %v262, %v289
  %v292 = vld [vmem:[%s2] sm:$0xff]
  %v293 = vld [vmem:[%s2 + $0x8] sm:$0xff]
  %vm294 = vcmask 64512
  %v296 = vsel %vm294, %v292, 0
  %v299 = vsel %vm294, %v293, 0
  %301 = vmatprep.subr.mxu0 %v291
  %302 = vmatpush1.msra.mxu0 %v290
  %303 = vmatprep.subr.mxu0 0.0
  %304 = vmatpush1.msra.mxu0 0.0
  %305 = vmatprep.subr.mxu0 0.0
  %306 = vmatpush1.msra.mxu0 0.0
  %307 = vmatprep.subr.mxu0 0.0
  %308 = vmatpush1.msra.mxu0 0.0
  %309 = vmatprep.subr.mxu0 0.0
  %310 = vmatpush1.msra.mxu0 0.0
  %311 = vmatprep.subr.mxu0 0.0
  %312 = vmatpush1.msra.mxu0 0.0
  %313 = vmatprep.subr.mxu0 0.0
  %314 = vmatpush1.msra.mxu0 0.0
  %315 = vmatprep.subr.mxu0 0.0
  %316 = vmatpush1.msra.mxu0 0.0
  %317 = vmatprep.subr.mxu0 0.0
  %318 = vmatpush1.msra.mxu0 0.0
  %319 = vmatprep.subr.mxu0 0.0
  %320 = vmatpush1.msra.mxu0 0.0
  %321 = vmatprep.subr.mxu0 0.0
  %322 = vmatpush1.msra.mxu0 0.0
  %323 = vmatprep.subr.mxu0 0.0
  %324 = vmatpush1.msra.mxu0 0.0
  %325 = vmatprep.subr.mxu0 0.0
  %326 = vmatpush1.msra.mxu0 0.0
  %327 = vmatprep.subr.mxu0 0.0
  %328 = vmatpush1.msra.mxu0 0.0
  %329 = vmatprep.subr.mxu0 0.0
  %330 = vmatpush1.msra.mxu0 0.0
  %331 = vmatprep.subr.mxu0 0.0
  %332 = vmatpush1.msra.mxu0 0.0
  %333 = vmatprep.subr.mxu0 0.0
  %334 = vmatpush1.msra.mxu0 0.0
  %335 = vmatprep.subr.mxu0 0.0
  %336 = vmatpush1.msra.mxu0 0.0
  %337 = vmatprep.subr.mxu0 0.0
  %338 = vmatpush1.msra.mxu0 0.0
  %339 = vmatprep.subr.mxu0 0.0
  %340 = vmatpush1.msra.mxu0 0.0
  %341 = vmatprep.subr.mxu0 0.0
  %342 = vmatpush1.msra.mxu0 0.0
  %343 = vmatprep.subr.mxu0 0.0
  %344 = vmatpush1.msra.mxu0 0.0
  %345 = vmatprep.subr.mxu0 0.0
  %346 = vmatpush1.msra.mxu0 0.0
  %347 = vmatprep.subr.mxu0 0.0
  %348 = vmatpush1.msra.mxu0 0.0
  %349 = vmatprep.subr.mxu0 0.0
  %350 = vmatpush1.msra.mxu0 0.0
  %351 = vmatprep.subr.mxu0 0.0
  %352 = vmatpush1.msra.mxu0 0.0
  %353 = vmatprep.subr.mxu0 0.0
  %354 = vmatpush1.msra.mxu0 0.0
  %355 = vmatprep.subr.mxu0 0.0
  %356 = vmatpush1.msra.mxu0 0.0
  %357 = vmatprep.subr.mxu0 0.0
  %358 = vmatpush1.msra.mxu0 0.0
  %359 = vmatprep.subr.mxu0 0.0
  %360 = vmatpush1.msra.mxu0 0.0
  %361 = vmatprep.subr.mxu0 0.0
  %362 = vmatpush1.msra.mxu0 0.0
  %363 = vmatprep.subr.mxu0 0.0
  %364 = vmatpush1.msra.mxu0 0.0
  %365 = vmatprep.mubr.f32.mxu0 0.0
  %366 = vmatmul.mubr.f32.gmra.mrb[0].mxu0 %v296
  %v367 = vpop.f32.mrb[0].mxu0
  %v368 = vadd.f32 0.0, %v367
  %v369 = vpop.f32.mrb[0].mxu0
  %v370 = vadd.f32 0.0, %v369
  %371 = vmatprep.mubr.f32.mxu0 0.0
  %372 = vmatmul.mubr.f32.gmra.mrb[0].mxu0 %v299
  %v373 = vpop.f32.mrb[0].mxu0
  %v374 = vadd.f32 0.0, %v373
  %v375 = vpop.f32.mrb[0].mxu0
  %v376 = vadd.f32 0.0, %v375
  %377 = vdwg.mxu0
  %378 = vst [vmem:[%s4] sm:$0xff] %v368
  %379 = vst [vmem:[%s4 + $0x8] sm:$0xff] %v370
  %380 = vst [vmem:[%s4 + $0x10] sm:$0xff] %v374
  %381 = vst [vmem:[%s4 + $0x18] sm:$0xff] %v376
  // Predicated region
  $region18: #{separable_conv2d.1} parent=0 // pred_check
    _
  $region19: #{separable_conv2d.1} parent=0 // pred_check_branch
    %383 = sbr.rel (0) target = $region21
  $region20: #{separable_conv2d.1} parent=0 // pred_region
    _
  $region21: #{separable_conv2d.1} parent=0 // pred_fallthru
    _
  // Predicated region
  $region22: #{separable_conv2d.1} parent=0 // pred_check
    _
  $region23: #{separable_conv2d.1} parent=0 // pred_check_branch
    %385 = sbr.rel (0) target = $region25
  $region24: #{separable_conv2d.1} parent=0 // pred_region
    _
  $region25: #{separable_conv2d.1} parent=0 // pred_fallthru
    _

</llo_original>
